<compile_context>
chip_gen: v6e
topology: v6e:2x2x1
jax: 0.10.0
libtpu: 0.0.40
codegen_flags: <defaults>
</compile_context>

<pallas_src>
import functools
import math

import jax
import jax.numpy as jnp
from jax.experimental import pallas as pl
from jax.experimental.pallas import tpu as pltpu

NUM_ATOMS = 51


# ----------------------------------------------------------------------------
# Pallas kernel: 4 fused matmuls + per-action softmax + one store.
# Everything is tiny, so each array is a single full-array VMEM block (no grid).
# ----------------------------------------------------------------------------
def rainbow_kernel(num_actions, num_atoms,
                   x_ref,
                   w1_ref, b1_ref,
                   w2_ref, b2_ref,
                   wva1_ref, bva1_ref,
                   wq_ref, bq_ref,
                   out_ref):
    x = x_ref[...]

    # feature trunk: (B, in) -> (B, 32) -> (B, 64)
    h1 = jnp.maximum(
        jnp.dot(x, w1_ref[...], preferred_element_type=jnp.float32) + b1_ref[...], 0.0)
    h2 = jnp.maximum(
        jnp.dot(h1, w2_ref[...], preferred_element_type=jnp.float32) + b2_ref[...], 0.0)

    # fused value/advantage first layer: (B, 64) -> (B, 128) = [hv | ha]
    hva = jnp.maximum(
        jnp.dot(h2, wva1_ref[...], preferred_element_type=jnp.float32) + bva1_ref[...],
        0.0)

    # fused heads + dueling combine (baked into wq/bq in prepare_params):
    # q[b, a*num_atoms + j] = V(h)[b, j] + A_a(h)[b, j] - mean_a' A_a'(h)[b, j]
    q = jnp.dot(hva, wq_ref[...], preferred_element_type=jnp.float32) + bq_ref[...]

    # per-action softmax over atoms (A is a tiny static constant); the dominant
    # matmul cost is already fused, these are a handful of vreg ops.
    probs = []
    for a in range(num_actions):
        qa = q[:, a * num_atoms:(a + 1) * num_atoms]
        qa = qa - jnp.max(qa, axis=-1, keepdims=True)
        e = jnp.exp(qa)
        s = jnp.sum(e, axis=-1, keepdims=True)
        inv = pl.reciprocal(s, approx=True)      # EUP slot, ~free
        inv = inv * (2.0 - s * inv)              # one Newton step -> ~f32 accurate
        probs.append(e * inv)

    # single lane-dense store: (B, A*num_atoms)
    out_ref[...] = jnp.concatenate(probs, axis=-1)


# ----------------------------------------------------------------------------
# One-time parameter preparation: transpose, fuse, and fold the dueling
# combine into the head weights.  Run ONCE, outside the per-call path.
# ----------------------------------------------------------------------------
def prepare_params(params, num_actions, num_atoms=NUM_ATOMS):
    A, N = num_actions, num_atoms

    w1t = params["w1"].T                              # (in, 32)
    b1 = params["b1"][None, :]                        # (1, 32)
    w2t = params["w2"].T                              # (32, 64)
    b2 = params["b2"][None, :]                        # (1, 64)

    # fused value1 | advantage1 : (64, 128), bias (1, 128)
    wva1 = jnp.concatenate([params["wv1"].T, params["wa1"].T], axis=1)
    bva1 = jnp.concatenate([params["bv1"], params["ba1"]])[None, :]

    # fused heads + dueling combine.
    # wv2: (N, 64) -> (64, N);  wa2: (A*N, 64), row a*N+j = (action a, atom j).
    wv2t = params["wv2"].T                            # (64, N)
    wa2t = params["wa2"].reshape(A, N, 64).transpose(0, 2, 1)      # (A, 64, N)
    wa2c = wa2t - jnp.mean(wa2t, axis=0, keepdims=True)            # centered adv
    wq_top = jnp.tile(wv2t, (1, A))                                # hv contribution
    wq_bot = jnp.transpose(wa2c, (1, 0, 2)).reshape(64, A * N)     # ha contribution
    wq = jnp.concatenate([wq_top, wq_bot], axis=0)                 # (128, A*N)

    ba2c = params["ba2"].reshape(A, N)
    ba2c = ba2c - jnp.mean(ba2c, axis=0, keepdims=True)
    bq = (params["bv2"][None, :] + ba2c).reshape(1, A * N)         # (1, A*N)

    return (w1t, b1, w2t, b2, wva1, bva1, wq, bq)


# ----------------------------------------------------------------------------
# Wrapper: pallas_call with full-VMEM blocks, no grid.  Output reshaped
# (row-major, free) to the PyTorch convention (B, num_actions, num_atoms).
# ----------------------------------------------------------------------------
def rainbow_forward(x, prepped, num_actions, num_atoms=NUM_ATOMS):
    B = x.shape[0]
    args = (x.astype(jnp.float32),) + tuple(prepped)

    vmem_spec = pl.BlockSpec(memory_space=pltpu.MemorySpace.VMEM)
    out = pl.pallas_call(
        functools.partial(rainbow_kernel, num_actions, num_atoms),
        out_shape=jax.ShapeDtypeStruct((B, num_actions * num_atoms), jnp.float32),
        in_specs=[vmem_spec] * len(args),
        out_specs=vmem_spec,
    )(*args)

    return out.reshape(B, num_actions, num_atoms)


# ----------------------------------------------------------------------------
# Deterministic parameter construction (mirrors nn.Linear / NoisyLinear init).
# NoisyLinear is in training mode: effective weight = mu + sigma * eps,
# factorized Gaussian noise, derived from PRNGKey(0).
# ----------------------------------------------------------------------------
def _init_linear(key, in_f, out_f):
    kw, kb = jax.random.split(key)
    bound = 1.0 / math.sqrt(in_f)
    w = jax.random.uniform(kw, (out_f, in_f), jnp.float32, -bound, bound)
    b = jax.random.uniform(kb, (out_f,), jnp.float32, -bound, bound)
    return w, b


def _scale_noise(key, size):
    x = jax.random.normal(key, (size,), jnp.float32)
    return jnp.sign(x) * jnp.sqrt(jnp.abs(x))


def _init_noisy(key, in_f, out_f, std_init=0.4):
    kwm, kbm, kin, kout, kbe = jax.random.split(key, 5)
    mu_range = 1.0 / math.sqrt(in_f)
    w_mu = jax.random.uniform(kwm, (out_f, in_f), jnp.float32, -mu_range, mu_range)
    b_mu = jax.random.uniform(kbm, (out_f,), jnp.float32, -mu_range, mu_range)
    w_sigma = jnp.full((out_f, in_f), std_init / math.sqrt(in_f), jnp.float32)
    b_sigma = jnp.full((out_f,), std_init / math.sqrt(out_f), jnp.float32)
    eps_in = _scale_noise(kin, in_f)
    eps_out = _scale_noise(kout, out_f)
    w_eps = jnp.outer(eps_out, eps_in)
    b_eps = _scale_noise(kbe, out_f)
    return w_mu + w_sigma * w_eps, b_mu + b_sigma * b_eps


def make_params(key, num_inputs, num_actions, num_atoms=NUM_ATOMS):
    keys = jax.random.split(key, 6)
    w1, b1 = _init_linear(keys[0], num_inputs, 32)
    w2, b2 = _init_linear(keys[1], 32, 64)
    wv1, bv1 = _init_noisy(keys[2], 64, 64)
    wv2, bv2 = _init_noisy(keys[3], 64, num_atoms)
    wa1, ba1 = _init_noisy(keys[4], 64, 64)
    wa2, ba2 = _init_noisy(keys[5], 64, num_atoms * num_actions)
    return dict(w1=w1, b1=b1, w2=w2, b2=b2,
                wv1=wv1, bv1=bv1, wv2=wv2, bv2=bv2,
                wa1=wa1, ba1=ba1, wa2=wa2, ba2=ba2)


# ----------------------------------------------------------------------------
# Pure-JAX reference (same math, un-fused weights) for a sanity check.
# ----------------------------------------------------------------------------
def rainbow_reference(x, p, num_actions, num_atoms=NUM_ATOMS):
    B = x.shape[0]
    h = jax.nn.relu(x @ p["w1"].T + p["b1"])
    h = jax.nn.relu(h @ p["w2"].T + p["b2"])
    v = jax.nn.relu(h @ p["wv1"].T + p["bv1"])
    v = v @ p["wv2"].T + p["bv2"]
    a = jax.nn.relu(h @ p["wa1"].T + p["ba1"])
    a = a @ p["wa2"].T + p["ba2"]
    v = v.reshape(B, 1, num_atoms)
    a = a.reshape(B, num_actions, num_atoms)
    q = v + a - a.mean(axis=1, keepdims=True)
    return jax.nn.softmax(q.reshape(-1, num_atoms), axis=-1).reshape(
        B, num_actions, num_atoms)


if __name__ == "__main__":
    key = jax.random.PRNGKey(0)
    batch = 2            # NOTE: callers get better sublane utilization with B >= 8
    num_inputs = 16
    num_actions = 4

    kx, kp = jax.random.split(key)
    x = jax.random.normal(kx, (batch, num_inputs), jnp.float32)
    params = make_params(kp, num_inputs, num_actions)

    # One-time parameter prep (fusion + transposes) hoisted out of the hot path.
    prepped = jax.tree_util.tree_map(jax.block_until_ready,
                                     prepare_params(params, num_actions))

    fwd = jax.jit(rainbow_forward, static_argnums=(2, 3))
    out = fwd(x, prepped, num_actions, NUM_ATOMS)
    out = jax.block_until_ready(out)

    ref = rainbow_reference(x, params, num_actions)
    assert out.shape == (batch, num_actions, NUM_ATOMS)
    assert jnp.allclose(out, ref, atol=1e-5, rtol=1e-5), "mismatch vs reference"
    # probability distributions should sum to 1 over atoms
    assert jnp.allclose(out.sum(-1), 1.0, atol=1e-5)

    print("KERNEL_OK")
</pallas_src>

<mosaic_0001>
module attributes {stable_mosaic.version = 11 : i64} {
  func.func @rainbow_kernel(%arg0: memref<2x16xf32, #tpu.memory_space<vmem>>, %arg1: memref<16x32xf32, #tpu.memory_space<vmem>>, %arg2: memref<1x32xf32, #tpu.memory_space<vmem>>, %arg3: memref<32x64xf32, #tpu.memory_space<vmem>>, %arg4: memref<1x64xf32, #tpu.memory_space<vmem>>, %arg5: memref<64x128xf32, #tpu.memory_space<vmem>>, %arg6: memref<1x128xf32, #tpu.memory_space<vmem>>, %arg7: memref<128x204xf32, #tpu.memory_space<vmem>>, %arg8: memref<1x204xf32, #tpu.memory_space<vmem>>, %arg9: memref<2x204xf32, #tpu.memory_space<vmem>>) attributes {dimension_semantics = [], scalar_prefetch = 0 : i64, scratch_operands = 0 : i64, tpu.core_type = #tpu.core_type<tc>} {
    %c0 = arith.constant 0 : index
    %c0_0 = arith.constant 0 : index
    %0 = vector.load %arg0[%c0, %c0_0] : memref<2x16xf32, #tpu.memory_space<vmem>>, vector<2x16xf32>
    %c0_1 = arith.constant 0 : index
    %c0_2 = arith.constant 0 : index
    %1 = vector.load %arg1[%c0_1, %c0_2] : memref<16x32xf32, #tpu.memory_space<vmem>>, vector<16x32xf32>
    %cst = arith.constant dense<0.000000e+00> : vector<2x32xf32>
    %2 = tpu.matmul %0, %1, %cst {dimension_numbers = #tpu.dot_dimension_numbers<[1], [0], [0], [1], [0, 0, 1, 1], [], []>} : vector<2x16xf32>, vector<16x32xf32>, vector<2x32xf32> -> vector<2x32xf32>
    %c0_3 = arith.constant 0 : index
    %c0_4 = arith.constant 0 : index
    %3 = vector.load %arg2[%c0_3, %c0_4] : memref<1x32xf32, #tpu.memory_space<vmem>>, vector<1x32xf32>
    %4 = vector.broadcast %3 : vector<1x32xf32> to vector<2x32xf32>
    %5 = arith.addf %2, %4 : vector<2x32xf32>
    %cst_5 = arith.constant 0.000000e+00 : f32
    %6 = vector.broadcast %cst_5 : f32 to vector<2x32xf32>
    %7 = arith.maximumf %5, %6 : vector<2x32xf32>
    %c0_6 = arith.constant 0 : index
    %c0_7 = arith.constant 0 : index
    %8 = vector.load %arg3[%c0_6, %c0_7] : memref<32x64xf32, #tpu.memory_space<vmem>>, vector<32x64xf32>
    %cst_8 = arith.constant dense<0.000000e+00> : vector<2x64xf32>
    %9 = tpu.matmul %7, %8, %cst_8 {dimension_numbers = #tpu.dot_dimension_numbers<[1], [0], [0], [1], [0, 0, 1, 1], [], []>} : vector<2x32xf32>, vector<32x64xf32>, vector<2x64xf32> -> vector<2x64xf32>
    %c0_9 = arith.constant 0 : index
    %c0_10 = arith.constant 0 : index
    %10 = vector.load %arg4[%c0_9, %c0_10] : memref<1x64xf32, #tpu.memory_space<vmem>>, vector<1x64xf32>
    %11 = vector.broadcast %10 : vector<1x64xf32> to vector<2x64xf32>
    %12 = arith.addf %9, %11 : vector<2x64xf32>
    %cst_11 = arith.constant 0.000000e+00 : f32
    %13 = vector.broadcast %cst_11 : f32 to vector<2x64xf32>
    %14 = arith.maximumf %12, %13 : vector<2x64xf32>
    %c0_12 = arith.constant 0 : index
    %c0_13 = arith.constant 0 : index
    %15 = vector.load %arg5[%c0_12, %c0_13] : memref<64x128xf32, #tpu.memory_space<vmem>>, vector<64x128xf32>
    %cst_14 = arith.constant dense<0.000000e+00> : vector<2x128xf32>
    %16 = tpu.matmul %14, %15, %cst_14 {dimension_numbers = #tpu.dot_dimension_numbers<[1], [0], [0], [1], [0, 0, 1, 1], [], []>} : vector<2x64xf32>, vector<64x128xf32>, vector<2x128xf32> -> vector<2x128xf32>
    %c0_15 = arith.constant 0 : index
    %c0_16 = arith.constant 0 : index
    %17 = vector.load %arg6[%c0_15, %c0_16] : memref<1x128xf32, #tpu.memory_space<vmem>>, vector<1x128xf32>
    %18 = vector.broadcast %17 : vector<1x128xf32> to vector<2x128xf32>
    %19 = arith.addf %16, %18 : vector<2x128xf32>
    %cst_17 = arith.constant 0.000000e+00 : f32
    %20 = vector.broadcast %cst_17 : f32 to vector<2x128xf32>
    %21 = arith.maximumf %19, %20 : vector<2x128xf32>
    %c0_18 = arith.constant 0 : index
    %c0_19 = arith.constant 0 : index
    %22 = vector.load %arg7[%c0_18, %c0_19] : memref<128x204xf32, #tpu.memory_space<vmem>>, vector<128x204xf32>
    %cst_20 = arith.constant dense<0.000000e+00> : vector<2x204xf32>
    %23 = tpu.matmul %21, %22, %cst_20 {dimension_numbers = #tpu.dot_dimension_numbers<[1], [0], [0], [1], [0, 0, 1, 1], [], []>} : vector<2x128xf32>, vector<128x204xf32>, vector<2x204xf32> -> vector<2x204xf32>
    %c0_21 = arith.constant 0 : index
    %c0_22 = arith.constant 0 : index
    %24 = vector.load %arg8[%c0_21, %c0_22] : memref<1x204xf32, #tpu.memory_space<vmem>>, vector<1x204xf32>
    %25 = vector.broadcast %24 : vector<1x204xf32> to vector<2x204xf32>
    %26 = arith.addf %23, %25 : vector<2x204xf32>
    %27 = vector.extract_strided_slice %26 {offsets = [0, 0], sizes = [2, 51], strides = [1, 1]} : vector<2x204xf32> to vector<2x51xf32>
    %cst_23 = arith.constant dense<0xFF800000> : vector<2xf32>
    %28 = vector.multi_reduction <maximumf>, %27, %cst_23 [1] : vector<2x51xf32> to vector<2xf32>
    %29 = vector.shape_cast %28 : vector<2xf32> to vector<2x1xf32>
    %30 = vector.broadcast %29 : vector<2x1xf32> to vector<2x51xf32>
    %31 = arith.subf %27, %30 : vector<2x51xf32>
    %32 = math.exp %31 : vector<2x51xf32>
    %cst_24 = arith.constant dense<0.000000e+00> : vector<2xf32>
    %33 = vector.multi_reduction <add>, %32, %cst_24 [1] : vector<2x51xf32> to vector<2xf32>
    %34 = vector.shape_cast %33 : vector<2xf32> to vector<2x1xf32>
    %35 = tpu.reciprocal %34 {approx = true} : vector<2x1xf32> -> vector<2x1xf32>
    %36 = arith.mulf %34, %35 : vector<2x1xf32>
    %cst_25 = arith.constant 2.000000e+00 : f32
    %37 = vector.broadcast %cst_25 : f32 to vector<2x1xf32>
    %38 = arith.subf %37, %36 : vector<2x1xf32>
    %39 = arith.mulf %35, %38 : vector<2x1xf32>
    %40 = vector.broadcast %39 : vector<2x1xf32> to vector<2x51xf32>
    %41 = arith.mulf %32, %40 : vector<2x51xf32>
    %42 = vector.extract_strided_slice %26 {offsets = [0, 51], sizes = [2, 51], strides = [1, 1]} : vector<2x204xf32> to vector<2x51xf32>
    %cst_26 = arith.constant dense<0xFF800000> : vector<2xf32>
    %43 = vector.multi_reduction <maximumf>, %42, %cst_26 [1] : vector<2x51xf32> to vector<2xf32>
    %44 = vector.shape_cast %43 : vector<2xf32> to vector<2x1xf32>
    %45 = vector.broadcast %44 : vector<2x1xf32> to vector<2x51xf32>
    %46 = arith.subf %42, %45 : vector<2x51xf32>
    %47 = math.exp %46 : vector<2x51xf32>
    %cst_27 = arith.constant dense<0.000000e+00> : vector<2xf32>
    %48 = vector.multi_reduction <add>, %47, %cst_27 [1] : vector<2x51xf32> to vector<2xf32>
    %49 = vector.shape_cast %48 : vector<2xf32> to vector<2x1xf32>
    %50 = tpu.reciprocal %49 {approx = true} : vector<2x1xf32> -> vector<2x1xf32>
    %51 = arith.mulf %49, %50 : vector<2x1xf32>
    %cst_28 = arith.constant 2.000000e+00 : f32
    %52 = vector.broadcast %cst_28 : f32 to vector<2x1xf32>
    %53 = arith.subf %52, %51 : vector<2x1xf32>
    %54 = arith.mulf %50, %53 : vector<2x1xf32>
    %55 = vector.broadcast %54 : vector<2x1xf32> to vector<2x51xf32>
    %56 = arith.mulf %47, %55 : vector<2x51xf32>
    %57 = vector.extract_strided_slice %26 {offsets = [0, 102], sizes = [2, 51], strides = [1, 1]} : vector<2x204xf32> to vector<2x51xf32>
    %cst_29 = arith.constant dense<0xFF800000> : vector<2xf32>
    %58 = vector.multi_reduction <maximumf>, %57, %cst_29 [1] : vector<2x51xf32> to vector<2xf32>
    %59 = vector.shape_cast %58 : vector<2xf32> to vector<2x1xf32>
    %60 = vector.broadcast %59 : vector<2x1xf32> to vector<2x51xf32>
    %61 = arith.subf %57, %60 : vector<2x51xf32>
    %62 = math.exp %61 : vector<2x51xf32>
    %cst_30 = arith.constant dense<0.000000e+00> : vector<2xf32>
    %63 = vector.multi_reduction <add>, %62, %cst_30 [1] : vector<2x51xf32> to vector<2xf32>
    %64 = vector.shape_cast %63 : vector<2xf32> to vector<2x1xf32>
    %65 = tpu.reciprocal %64 {approx = true} : vector<2x1xf32> -> vector<2x1xf32>
    %66 = arith.mulf %64, %65 : vector<2x1xf32>
    %cst_31 = arith.constant 2.000000e+00 : f32
    %67 = vector.broadcast %cst_31 : f32 to vector<2x1xf32>
    %68 = arith.subf %67, %66 : vector<2x1xf32>
    %69 = arith.mulf %65, %68 : vector<2x1xf32>
    %70 = vector.broadcast %69 : vector<2x1xf32> to vector<2x51xf32>
    %71 = arith.mulf %62, %70 : vector<2x51xf32>
    %72 = vector.extract_strided_slice %26 {offsets = [0, 153], sizes = [2, 51], strides = [1, 1]} : vector<2x204xf32> to vector<2x51xf32>
    %cst_32 = arith.constant dense<0xFF800000> : vector<2xf32>
    %73 = vector.multi_reduction <maximumf>, %72, %cst_32 [1] : vector<2x51xf32> to vector<2xf32>
    %74 = vector.shape_cast %73 : vector<2xf32> to vector<2x1xf32>
    %75 = vector.broadcast %74 : vector<2x1xf32> to vector<2x51xf32>
    %76 = arith.subf %72, %75 : vector<2x51xf32>
    %77 = math.exp %76 : vector<2x51xf32>
    %cst_33 = arith.constant dense<0.000000e+00> : vector<2xf32>
    %78 = vector.multi_reduction <add>, %77, %cst_33 [1] : vector<2x51xf32> to vector<2xf32>
    %79 = vector.shape_cast %78 : vector<2xf32> to vector<2x1xf32>
    %80 = tpu.reciprocal %79 {approx = true} : vector<2x1xf32> -> vector<2x1xf32>
    %81 = arith.mulf %79, %80 : vector<2x1xf32>
    %cst_34 = arith.constant 2.000000e+00 : f32
    %82 = vector.broadcast %cst_34 : f32 to vector<2x1xf32>
    %83 = arith.subf %82, %81 : vector<2x1xf32>
    %84 = arith.mulf %80, %83 : vector<2x1xf32>
    %85 = vector.broadcast %84 : vector<2x1xf32> to vector<2x51xf32>
    %86 = arith.mulf %77, %85 : vector<2x51xf32>
    %87 = tpu.concatenate %41, %56, %71, %86 in 1 : vector<2x51xf32>, vector<2x51xf32>, vector<2x51xf32>, vector<2x51xf32> -> vector<2x204xf32>
    %c0_35 = arith.constant 0 : index
    %c0_36 = arith.constant 0 : index
    %88 = vector.load %arg9[%c0_35, %c0_36] : memref<2x204xf32, #tpu.memory_space<vmem>>, vector<2x204xf32>
    tpu.vector_store %arg9[%c0_35, %c0_36], %87 {strides = array<i32>} : memref<2x204xf32, #tpu.memory_space<vmem>>, vector<2x204xf32>,
    return
  }
}

</mosaic_0001>

<llo_original>
// kernel: rainbow_forward.1
$region0: #{rainbow_forward.1}
  #allocation0 [shape = 'u32[]', space=smem, size = 0x4, offset = 0x4, fixed_abs, tag = 'smem constant byte address 0x4 - core index']
  #allocation1 [shape = 'u32[144,128]{1,0:T(1,128)}', space=vmem, size = 0x12000, scoped, tag = 'internal scratch']
  %s0 = inlined_call_operand.vmem [shape: f32[2,16], index: 0, kind: input, shape index: {}]
  %s1 = inlined_call_operand.vmem [shape: f32[16,32], index: 1, kind: input, shape index: {}]
  %s2 = inlined_call_operand.vmem [shape: f32[1,32], index: 2, kind: input, shape index: {}]
  %s3 = inlined_call_operand.vmem [shape: f32[32,64], index: 3, kind: input, shape index: {}]
  %s4 = inlined_call_operand.vmem [shape: f32[1,64], index: 4, kind: input, shape index: {}]
  %s5 = inlined_call_operand.vmem [shape: f32[64,128], index: 5, kind: input, shape index: {}]
  %s6 = inlined_call_operand.vmem [shape: f32[1,128], index: 6, kind: input, shape index: {}]
  %s7 = inlined_call_operand.vmem [shape: f32[128,204], index: 7, kind: input, shape index: {}]
  %s8 = inlined_call_operand.vmem [shape: f32[1,204], index: 8, kind: input, shape index: {}]
  %s9 = inlined_call_operand.vmem [shape: f32[2,204], index: 9, kind: output, shape index: {}]
  %s10 = sld [smem:[#allocation0]]
  $region46: #{rainbow_forward.1} parent=0
    _
  %s12 = ssub.s32 1, %s10
  %s13 = scalar_select 0, %s12, %s10
  // Predicated region
  $region2: #{rainbow_forward.1} parent=0 // pred_check
    _
  $region3: #{rainbow_forward.1} parent=0 // pred_check_branch
    %15 = sbr.rel (0) target = $region5
  $region4: #{rainbow_forward.1} parent=0 // pred_region
    _
  $region5: #{rainbow_forward.1} parent=0 // pred_fallthru
    _
  // Predicated region
  $region6: #{rainbow_forward.1} parent=0 // pred_check
    _
  $region7: #{rainbow_forward.1} parent=0 // pred_check_branch
    %17 = sbr.rel (0) target = $region9
  $region8: #{rainbow_forward.1} parent=0 // pred_region
    _
  $region9: #{rainbow_forward.1} parent=0 // pred_fallthru
    _
  // Predicated region
  $region10: #{rainbow_forward.1} parent=0 // pred_check
    _
  $region11: #{rainbow_forward.1} parent=0 // pred_check_branch
    %19 = sbr.rel (0) target = $region13
  $region12: #{rainbow_forward.1} parent=0 // pred_region
    _
  $region13: #{rainbow_forward.1} parent=0 // pred_fallthru
    _
  // Predicated region
  $region14: #{rainbow_forward.1} parent=0 // pred_check
    _
  $region15: #{rainbow_forward.1} parent=0 // pred_check_branch
    %21 = sbr.rel (0) target = $region17
  $region16: #{rainbow_forward.1} parent=0 // pred_region
    _
  $region17: #{rainbow_forward.1} parent=0 // pred_fallthru
    _
  // Predicated region
  $region18: #{rainbow_forward.1} parent=0 // pred_check
    _
  $region19: #{rainbow_forward.1} parent=0 // pred_check_branch
    %23 = sbr.rel (0) target = $region21
  $region20: #{rainbow_forward.1} parent=0 // pred_region
    _
  $region21: #{rainbow_forward.1} parent=0 // pred_fallthru
    _
  // Predicated region
  $region22: #{rainbow_forward.1} parent=0 // pred_check
    _
  $region23: #{rainbow_forward.1} parent=0 // pred_check_branch
    %25 = sbr.rel (0) target = $region25
  $region24: #{rainbow_forward.1} parent=0 // pred_region
    _
  $region25: #{rainbow_forward.1} parent=0 // pred_fallthru
    _
  // Predicated region
  $region26: #{rainbow_forward.1} parent=0 // pred_check
    _
  $region27: #{rainbow_forward.1} parent=0 // pred_check_branch
    %27 = sbr.rel (0) target = $region29
  $region28: #{rainbow_forward.1} parent=0 // pred_region
    _
  $region29: #{rainbow_forward.1} parent=0 // pred_fallthru
    _
  // Predicated region
  $region30: #{rainbow_forward.1} parent=0 // pred_check
    _
  $region31: #{rainbow_forward.1} parent=0 // pred_check_branch
    %29 = sbr.rel (0) target = $region33
  $region32: #{rainbow_forward.1} parent=0 // pred_region
    _
  $region33: #{rainbow_forward.1} parent=0 // pred_fallthru
    _
  // Predicated region
  $region34: #{rainbow_forward.1} parent=0 // pred_check
    _
  $region35: #{rainbow_forward.1} parent=0 // pred_check_branch
    %31 = sbr.rel (0) target = $region37
  $region36: #{rainbow_forward.1} parent=0 // pred_region
    _
  $region37: #{rainbow_forward.1} parent=0 // pred_fallthru
    _
  %v32 = vld [vmem:[%s0] sm:$0x3]
  %v33 = vld [vmem:[%s1] sm:$0xff]
  %v34 = vld [vmem:[%s1 + $0x8] sm:$0xff]
  %v35 = vld [vmem:[%s2] sm:$0x1]
  %v37 = vlaneseq
  %v38 = vshrl.u32 %v37, 7
  %v39 = vsub.s32 0, %v38
  %v40 = vrot.slane %v35, %v39
  %vm42 = vcmask 130048
  %v44 = vsel %vm42, %v32, 0
  %46 = vmatprep.subr.mxu0 0.0
  %47 = vmatpush1.msra.mxu0 0.0
  %48 = vmatprep.subr.mxu0 0.0
  %49 = vmatpush1.msra.mxu0 0.0
  %50 = vmatprep.subr.mxu0 0.0
  %51 = vmatpush1.msra.mxu0 0.0
  %52 = vmatprep.subr.mxu0 0.0
  %53 = vmatpush1.msra.mxu0 0.0
  %54 = vmatprep.subr.mxu0 0.0
  %55 = vmatpush1.msra.mxu0 0.0
  %56 = vmatprep.subr.mxu0 0.0
  %57 = vmatpush1.msra.mxu0 0.0
  %58 = vmatprep.subr.mxu0 0.0
  %59 = vmatpush1.msra.mxu0 0.0
  %60 = vmatprep.subr.mxu0 0.0
  %61 = vmatpush1.msra.mxu0 0.0
  %62 = vmatprep.subr.mxu0 0.0
  %63 = vmatpush1.msra.mxu0 0.0
  %64 = vmatprep.subr.mxu0 0.0
  %65 = vmatpush1.msra.mxu0 0.0
  %66 = vmatprep.subr.mxu0 0.0
  %67 = vmatpush1.msra.mxu0 0.0
  %68 = vmatprep.subr.mxu0 0.0
  %69 = vmatpush1.msra.mxu0 0.0
  %70 = vmatprep.subr.mxu0 0.0
  %71 = vmatpush1.msra.mxu0 0.0
  %72 = vmatprep.subr.mxu0 0.0
  %73 = vmatpush1.msra.mxu0 0.0
  %74 = vmatprep.subr.mxu0 0.0
  %75 = vmatpush1.msra.mxu0 %v34
  %76 = vmatprep.subr.mxu0 0.0
  %77 = vmatpush1.msra.mxu0 %v33
  %78 = vmatprep.subr.mxu0 0.0
  %79 = vmatpush2.msra.mxu0 0.0
  %80 = vmatprep.subr.mxu0 0.0
  %81 = vmatpush2.msra.mxu0 0.0
  %82 = vmatprep.subr.mxu0 0.0
  %83 = vmatpush2.msra.mxu0 0.0
  %84 = vmatprep.subr.mxu0 0.0
  %85 = vmatpush2.msra.mxu0 0.0
  %86 = vmatprep.subr.mxu0 0.0
  %87 = vmatpush2.msra.mxu0 0.0
  %88 = vmatprep.subr.mxu0 0.0
  %89 = vmatpush2.msra.mxu0 0.0
  %90 = vmatprep.subr.mxu0 0.0
  %91 = vmatpush2.msra.mxu0 0.0
  %92 = vmatprep.subr.mxu0 0.0
  %93 = vmatpush2.msra.mxu0 0.0
  %94 = vmatprep.subr.mxu0 0.0
  %95 = vmatpush2.msra.mxu0 0.0
  %96 = vmatprep.subr.mxu0 0.0
  %97 = vmatpush2.msra.mxu0 0.0
  %98 = vmatprep.subr.mxu0 0.0
  %99 = vmatpush2.msra.mxu0 0.0
  %100 = vmatprep.subr.mxu0 0.0
  %101 = vmatpush2.msra.mxu0 0.0
  %102 = vmatprep.subr.mxu0 0.0
  %103 = vmatpush2.msra.mxu0 0.0
  %104 = vmatprep.subr.mxu0 0.0
  %105 = vmatpush2.msra.mxu0 0.0
  %106 = vmatprep.subr.mxu0 0.0
  %107 = vmatpush2.msra.mxu0 0.0
  %108 = vmatprep.subr.mxu0 0.0
  %109 = vmatpush2.msra.mxu0 0.0
  %110 = vmatprep.mubr.f32.mxu0 0.0
  %111 = vmatmul.mubr.f32.gmra.mxu0 %v44
  %v112 = vpop.f32.mrf.mxu0
  %v113 = vadd.f32 %v40, %v112
  %v114 = vpop.f32.mrf.mxu0
  %115 = vdwg.mxu0
  %v116 = vmax.f32 %v113, 0.0
  %v117 = vld [vmem:[%s3] sm:$0xff]
  %v118 = vld [vmem:[%s3 + $0x8] sm:$0xff]
  %v119 = vld [vmem:[%s3 + $0x10] sm:$0xff]
  %v120 = vld [vmem:[%s3 + $0x18] sm:$0xff]
  %v121 = vld [vmem:[%s4] sm:$0x1]
  %v123 = vlaneseq
  %v124 = vshrl.u32 %v123, 7
  %v125 = vsub.s32 0, %v124
  %v126 = vrot.slane %v121, %v125
  %vm128 = vcmask 261120
  %v130 = vsel %vm128, %v116, 0
  %132 = vmatprep.subr.mxu0 0.0
  %133 = vmatpush1.msra.mxu0 0.0
  %134 = vmatprep.subr.mxu0 0.0
  %135 = vmatpush1.msra.mxu0 0.0
  %136 = vmatprep.subr.mxu0 0.0
  %137 = vmatpush1.msra.mxu0 0.0
  %138 = vmatprep.subr.mxu0 0.0
  %139 = vmatpush1.msra.mxu0 0.0
  %140 = vmatprep.subr.mxu0 0.0
  %141 = vmatpush1.msra.mxu0 0.0
  %142 = vmatprep.subr.mxu0 0.0
  %143 = vmatpush1.msra.mxu0 0.0
  %144 = vmatprep.subr.mxu0 0.0
  %145 = vmatpush1.msra.mxu0 0.0
  %146 = vmatprep.subr.mxu0 0.0
  %147 = vmatpush1.msra.mxu0 0.0
  %148 = vmatprep.subr.mxu0 0.0
  %149 = vmatpush1.msra.mxu0 0.0
  %150 = vmatprep.subr.mxu0 0.0
  %151 = vmatpush1.msra.mxu0 0.0
  %152 = vmatprep.subr.mxu0 0.0
  %153 = vmatpush1.msra.mxu0 0.0
  %154 = vmatprep.subr.mxu0 0.0
  %155 = vmatpush1.msra.mxu0 0.0
  %156 = vmatprep.subr.mxu0 0.0
  %157 = vmatpush1.msra.mxu0 %v120
  %158 = vmatprep.subr.mxu0 0.0
  %159 = vmatpush1.msra.mxu0 %v119
  %160 = vmatprep.subr.mxu0 0.0
  %161 = vmatpush1.msra.mxu0 %v118
  %162 = vmatprep.subr.mxu0 0.0
  %163 = vmatpush1.msra.mxu0 %v117
  %164 = vmatprep.subr.mxu0 0.0
  %165 = vmatpush2.msra.mxu0 0.0
  %166 = vmatprep.subr.mxu0 0.0
  %167 = vmatpush2.msra.mxu0 0.0
  %168 = vmatprep.subr.mxu0 0.0
  %169 = vmatpush2.msra.mxu0 0.0
  %170 = vmatprep.subr.mxu0 0.0
  %171 = vmatpush2.msra.mxu0 0.0
  %172 = vmatprep.subr.mxu0 0.0
  %173 = vmatpush2.msra.mxu0 0.0
  %174 = vmatprep.subr.mxu0 0.0
  %175 = vmatpush2.msra.mxu0 0.0
  %176 = vmatprep.subr.mxu0 0.0
  %177 = vmatpush2.msra.mxu0 0.0
  %178 = vmatprep.subr.mxu0 0.0
  %179 = vmatpush2.msra.mxu0 0.0
  %180 = vmatprep.subr.mxu0 0.0
  %181 = vmatpush2.msra.mxu0 0.0
  %182 = vmatprep.subr.mxu0 0.0
  %183 = vmatpush2.msra.mxu0 0.0
  %184 = vmatprep.subr.mxu0 0.0
  %185 = vmatpush2.msra.mxu0 0.0
  %186 = vmatprep.subr.mxu0 0.0
  %187 = vmatpush2.msra.mxu0 0.0
  %188 = vmatprep.subr.mxu0 0.0
  %189 = vmatpush2.msra.mxu0 0.0
  %190 = vmatprep.subr.mxu0 0.0
  %191 = vmatpush2.msra.mxu0 0.0
  %192 = vmatprep.subr.mxu0 0.0
  %193 = vmatpush2.msra.mxu0 0.0
  %194 = vmatprep.subr.mxu0 0.0
  %195 = vmatpush2.msra.mxu0 0.0
  %196 = vmatprep.mubr.f32.mxu0 0.0
  %197 = vmatmul.mubr.f32.gmra.mxu0 %v130
  %v198 = vpop.f32.mrf.mxu0
  %v199 = vadd.f32 %v126, %v198
  %v200 = vpop.f32.mrf.mxu0
  %201 = vdwg.mxu0
  %v202 = vmax.f32 %v199, 0.0
  %v203 = vld [vmem:[%s5] sm:$0xff]
  %v204 = vld [vmem:[%s5 + $0x8] sm:$0xff]
  %v205 = vld [vmem:[%s5 + $0x10] sm:$0xff]
  %v206 = vld [vmem:[%s5 + $0x18] sm:$0xff]
  %v207 = vld [vmem:[%s5 + $0x20] sm:$0xff]
  %v208 = vld [vmem:[%s5 + $0x28] sm:$0xff]
  %v209 = vld [vmem:[%s5 + $0x30] sm:$0xff]
  %v210 = vld [vmem:[%s5 + $0x38] sm:$0xff]
  %v211 = vld [vmem:[%s6] sm:$0x1]
  %v213 = vlaneseq
  %v214 = vshrl.u32 %v213, 7
  %v215 = vsub.s32 0, %v214
  %v216 = vrot.slane %v211, %v215
  %vm218 = vcmask 523264
  %v220 = vsel %vm218, %v202, 0
  %222 = vmatprep.subr.mxu0 0.0
  %223 = vmatpush1.msra.mxu0 0.0
  %224 = vmatprep.subr.mxu0 0.0
  %225 = vmatpush1.msra.mxu0 0.0
  %226 = vmatprep.subr.mxu0 0.0
  %227 = vmatpush1.msra.mxu0 0.0
  %228 = vmatprep.subr.mxu0 0.0
  %229 = vmatpush1.msra.mxu0 0.0
  %230 = vmatprep.subr.mxu0 0.0
  %231 = vmatpush1.msra.mxu0 0.0
  %232 = vmatprep.subr.mxu0 0.0
  %233 = vmatpush1.msra.mxu0 0.0
  %234 = vmatprep.subr.mxu0 0.0
  %235 = vmatpush1.msra.mxu0 0.0
  %236 = vmatprep.subr.mxu0 0.0
  %237 = vmatpush1.msra.mxu0 0.0
  %238 = vmatprep.subr.mxu0 0.0
  %239 = vmatpush1.msra.mxu0 %v210
  %240 = vmatprep.subr.mxu0 0.0
  %241 = vmatpush1.msra.mxu0 %v209
  %242 = vmatprep.subr.mxu0 0.0
  %243 = vmatpush1.msra.mxu0 %v208
  %244 = vmatprep.subr.mxu0 0.0
  %245 = vmatpush1.msra.mxu0 %v207
  %246 = vmatprep.subr.mxu0 0.0
  %247 = vmatpush1.msra.mxu0 %v206
  %248 = vmatprep.subr.mxu0 0.0
  %249 = vmatpush1.msra.mxu0 %v205
  %250 = vmatprep.subr.mxu0 0.0
  %251 = vmatpush1.msra.mxu0 %v204
  %252 = vmatprep.subr.mxu0 0.0
  %253 = vmatpush1.msra.mxu0 %v203
  %254 = vmatprep.subr.mxu0 0.0
  %255 = vmatpush2.msra.mxu0 0.0
  %256 = vmatprep.subr.mxu0 0.0
  %257 = vmatpush2.msra.mxu0 0.0
  %258 = vmatprep.subr.mxu0 0.0
  %259 = vmatpush2.msra.mxu0 0.0
  %260 = vmatprep.subr.mxu0 0.0
  %261 = vmatpush2.msra.mxu0 0.0
  %262 = vmatprep.subr.mxu0 0.0
  %263 = vmatpush2.msra.mxu0 0.0
  %264 = vmatprep.subr.mxu0 0.0
  %265 = vmatpush2.msra.mxu0 0.0
  %266 = vmatprep.subr.mxu0 0.0
  %267 = vmatpush2.msra.mxu0 0.0
  %268 = vmatprep.subr.mxu0 0.0
  %269 = vmatpush2.msra.mxu0 0.0
  %270 = vmatprep.subr.mxu0 0.0
  %271 = vmatpush2.msra.mxu0 0.0
  %272 = vmatprep.subr.mxu0 0.0
  %273 = vmatpush2.msra.mxu0 0.0
  %274 = vmatprep.subr.mxu0 0.0
  %275 = vmatpush2.msra.mxu0 0.0
  %276 = vmatprep.subr.mxu0 0.0
  %277 = vmatpush2.msra.mxu0 0.0
  %278 = vmatprep.subr.mxu0 0.0
  %279 = vmatpush2.msra.mxu0 0.0
  %280 = vmatprep.subr.mxu0 0.0
  %281 = vmatpush2.msra.mxu0 0.0
  %282 = vmatprep.subr.mxu0 0.0
  %283 = vmatpush2.msra.mxu0 0.0
  %284 = vmatprep.subr.mxu0 0.0
  %285 = vmatpush2.msra.mxu0 0.0
  %286 = vmatprep.mubr.f32.mxu0 0.0
  %287 = vmatmul.mubr.f32.gmra.mxu0 %v220
  %v288 = vpop.f32.mrf.mxu0
  %v289 = vadd.f32 %v216, %v288
  %v290 = vpop.f32.mrf.mxu0
  %291 = vdwg.mxu0
  %v292 = vmax.f32 %v289, 0.0
  %v293 = vld [vmem:[%s7] sm:$0xff]
  %v294 = vld [vmem:[%s7 + $0x8] sm:$0xff]
  %v295 = vld [vmem:[%s7 + $0x10] sm:$0xff]
  %v296 = vld [vmem:[%s7 + $0x18] sm:$0xff]
  %v297 = vld [vmem:[%s7 + $0x20] sm:$0xff]
  %v298 = vld [vmem:[%s7 + $0x28] sm:$0xff]
  %v299 = vld [vmem:[%s7 + $0x30] sm:$0xff]
  %v300 = vld [vmem:[%s7 + $0x38] sm:$0xff]
  %v301 = vld [vmem:[%s7 + $0x40] sm:$0xff]
  %v302 = vld [vmem:[%s7 + $0x48] sm:$0xff]
  %v303 = vld [vmem:[%s7 + $0x50] sm:$0xff]
  %v304 = vld [vmem:[%s7 + $0x58] sm:$0xff]
  %v305 = vld [vmem:[%s7 + $0x60] sm:$0xff]
  %v306 = vld [vmem:[%s7 + $0x68] sm:$0xff]
  %v307 = vld [vmem:[%s7 + $0x70] sm:$0xff]
  %v308 = vld [vmem:[%s7 + $0x78] sm:$0xff]
  %v309 = vld [vmem:[%s7 + $0x80] sm:$0xff]
  %v310 = vld [vmem:[%s7 + $0x88] sm:$0xff]
  %v311 = vld [vmem:[%s7 + $0x90] sm:$0xff]
  %v312 = vld [vmem:[%s7 + $0x98] sm:$0xff]
  %v313 = vld [vmem:[%s7 + $0xa0] sm:$0xff]
  %v314 = vld [vmem:[%s7 + $0xa8] sm:$0xff]
  %v315 = vld [vmem:[%s7 + $0xb0] sm:$0xff]
  %v316 = vld [vmem:[%s7 + $0xb8] sm:$0xff]
  %v317 = vld [vmem:[%s7 + $0xc0] sm:$0xff]
  %v318 = vld [vmem:[%s7 + $0xc8] sm:$0xff]
  %v319 = vld [vmem:[%s7 + $0xd0] sm:$0xff]
  %v320 = vld [vmem:[%s7 + $0xd8] sm:$0xff]
  %v321 = vld [vmem:[%s7 + $0xe0] sm:$0xff]
  %v322 = vld [vmem:[%s7 + $0xe8] sm:$0xff]
  %v323 = vld [vmem:[%s7 + $0xf0] sm:$0xff]
  %v324 = vld [vmem:[%s7 + $0xf8] sm:$0xff]
  %v325 = vld [vmem:[%s8] sm:$0x3]
  %v327 = vlaneseq
  %v328 = vshrl.u32 %v327, 7
  %v329 = vsub.s32 0, %v328
  %v330 = vrot.slane %v325, %v329
  %v331 = vlaneseq
  %v332 = vshrl.u32 %v331, 7
  %v333 = vsub.s32 1, %v332
  %v334 = vrot.slane %v325, %v333
  %337 = vmatprep.subr.mxu0 %v324
  %338 = vmatpush1.msra.mxu0 %v323
  %339 = vmatprep.subr.mxu0 %v322
  %340 = vmatpush1.msra.mxu0 %v321
  %341 = vmatprep.subr.mxu0 %v320
  %342 = vmatpush1.msra.mxu0 %v319
  %343 = vmatprep.subr.mxu0 %v318
  %344 = vmatpush1.msra.mxu0 %v317
  %345 = vmatprep.subr.mxu0 %v316
  %346 = vmatpush1.msra.mxu0 %v315
  %347 = vmatprep.subr.mxu0 %v314
  %348 = vmatpush1.msra.mxu0 %v313
  %349 = vmatprep.subr.mxu0 %v312
  %350 = vmatpush1.msra.mxu0 %v311
  %351 = vmatprep.subr.mxu0 %v310
  %352 = vmatpush1.msra.mxu0 %v309
  %353 = vmatprep.subr.mxu0 %v308
  %354 = vmatpush1.msra.mxu0 %v307
  %355 = vmatprep.subr.mxu0 %v306
  %356 = vmatpush1.msra.mxu0 %v305
  %357 = vmatprep.subr.mxu0 %v304
  %358 = vmatpush1.msra.mxu0 %v303
  %359 = vmatprep.subr.mxu0 %v302
  %360 = vmatpush1.msra.mxu0 %v301
  %361 = vmatprep.subr.mxu0 %v300
  %362 = vmatpush1.msra.mxu0 %v299
  %363 = vmatprep.subr.mxu0 %v298
  %364 = vmatpush1.msra.mxu0 %v297
  %365 = vmatprep.subr.mxu0 %v296
  %366 = vmatpush1.msra.mxu0 %v295
  %367 = vmatprep.subr.mxu0 %v294
  %368 = vmatpush1.msra.mxu0 %v293
  %369 = vmatprep.subr.mxu0 0.0
  %370 = vmatpush2.msra.mxu0 0.0
  %371 = vmatprep.subr.mxu0 0.0
  %372 = vmatpush2.msra.mxu0 0.0
  %373 = vmatprep.subr.mxu0 0.0
  %374 = vmatpush2.msra.mxu0 0.0
  %375 = vmatprep.subr.mxu0 0.0
  %376 = vmatpush2.msra.mxu0 0.0
  %377 = vmatprep.subr.mxu0 0.0
  %378 = vmatpush2.msra.mxu0 0.0
  %379 = vmatprep.subr.mxu0 0.0
  %380 = vmatpush2.msra.mxu0 0.0
  %381 = vmatprep.subr.mxu0 0.0
  %382 = vmatpush2.msra.mxu0 0.0
  %383 = vmatprep.subr.mxu0 0.0
  %384 = vmatpush2.msra.mxu0 0.0
  %385 = vmatprep.subr.mxu0 0.0
  %386 = vmatpush2.msra.mxu0 0.0
  %387 = vmatprep.subr.mxu0 0.0
  %388 = vmatpush2.msra.mxu0 0.0
  %389 = vmatprep.subr.mxu0 0.0
  %390 = vmatpush2.msra.mxu0 0.0
  %391 = vmatprep.subr.mxu0 0.0
  %392 = vmatpush2.msra.mxu0 0.0
  %393 = vmatprep.subr.mxu0 0.0
  %394 = vmatpush2.msra.mxu0 0.0
  %395 = vmatprep.subr.mxu0 0.0
  %396 = vmatpush2.msra.mxu0 0.0
  %397 = vmatprep.subr.mxu0 0.0
  %398 = vmatpush2.msra.mxu0 0.0
  %399 = vmatprep.subr.mxu0 0.0
  %400 = vmatpush2.msra.mxu0 0.0
  %401 = vmatprep.mubr.f32.mxu0 0.0
  %402 = vmatmul.mubr.f32.gmra.mxu0 %v292
  %v403 = vpop.f32.mrf.mxu0
  %v404 = vadd.f32 %v330, %v403
  %v405 = vpop.f32.mrf.mxu0
  %v406 = vadd.f32 %v334, %v405
  %407 = vdwg.mxu0
  %vm408 = vcmask 410624
  %v409 = vsel %vm408, %v404, -inf
  %410 = vmax.xlane.f32.xlu0 %v409
  %v411 = vpop.xlane.xlu0 %410
  %v412 = vsub.f32 %v404, %v411
  %v413 = vmul.f32 %v412, 1.442695
  %v414 = vpow.pop %v413
  %v415 = vsel %vm408, %v414, 0.0
  %416 = vadd.xlane.f32.xlu0 %v415
  %v417 = vpop.xlane.xlu0 %416
  %v418 = vrcp.pop %v417
  %v419 = vmul.f32 %v417, %v418
  %v420 = vsub.f32 2.0, %v419
  %v421 = vmul.f32 %v418, %v420
  %v422 = vmul.f32 %v414, %v421
  %vm423 = vcmask 828824
  %v424 = vsel %vm423, %v404, -inf
  %425 = vmax.xlane.f32.xlu0 %v424
  %v426 = vpop.xlane.xlu0 %425
  %v427 = vsub.f32 %v404, %v426
  %v428 = vmul.f32 %v427, 1.442695
  %v429 = vpow.pop %v428
  %431 = vrot.lane.b32.xlu0 %v429, 77
  %v432 = vpop.permute.xlu0 %431
  %v434 = vsel %vm408, %v432, 0.0
  %435 = vadd.xlane.f32.xlu0 %v434
  %v436 = vpop.xlane.xlu0 %435
  %v437 = vrcp.pop %v436
  %v438 = vmul.f32 %v436, %v437
  %v439 = vsub.f32 2.0, %v438
  %v440 = vmul.f32 %v437, %v439
  %v441 = vmul.f32 %v429, %v440
  %vm442 = vcmask 1042224
  %v443 = vsel %vm442, %v404, -inf
  %vm444 = vcmask 197632
  %v445 = vsel %vm444, %v406, -inf
  %v446 = vmax.f32 %v443, %v445
  %447 = vmax.xlane.f32.xlu0 %v446
  %v448 = vpop.xlane.xlu0 %447
  %v449 = vsub.f32 %v404, %v448
  %v450 = vsub.f32 %v406, %v448
  %v451 = vmul.f32 %v449, 1.442695
  %v452 = vpow.pop %v451
  %v453 = vmul.f32 %v450, 1.442695
  %v454 = vpow.pop %v453
  %457 = vrot.lane.b32.xlu0 %v452, 26
  %v458 = vpop.permute.xlu0 %457
  %459 = vrot.lane.b32.xlu0 %v454, 26
  %v460 = vpop.permute.xlu0 %459
  %vm461 = vcmask 211968
  %v462 = vsel %vm461, %v458, %v460
  %v464 = vsel %vm408, %v462, 0.0
  %465 = vadd.xlane.f32.xlu0 %v464
  %v466 = vpop.xlane.xlu0 %465
  %v467 = vrcp.pop %v466
  %v468 = vmul.f32 %v466, %v467
  %v469 = vsub.f32 2.0, %v468
  %v470 = vmul.f32 %v467, %v469
  %v471 = vmul.f32 %v452, %v470
  %v472 = vmul.f32 %v454, %v470
  %vm473 = vcmask 615624
  %v474 = vsel %vm473, %v406, -inf
  %475 = vmax.xlane.f32.xlu0 %v474
  %v476 = vpop.xlane.xlu0 %475
  %v477 = vsub.f32 %v406, %v476
  %v478 = vmul.f32 %v477, 1.442695
  %v479 = vpow.pop %v478
  %481 = vrot.lane.b32.xlu0 %v479, 103
  %v482 = vpop.permute.xlu0 %481
  %v484 = vsel %vm408, %v482, 0.0
  %485 = vadd.xlane.f32.xlu0 %v484
  %v486 = vpop.xlane.xlu0 %485
  %v487 = vrcp.pop %v486
  %v488 = vmul.f32 %v486, %v487
  %v489 = vsub.f32 2.0, %v488
  %v490 = vmul.f32 %v487, %v489
  %v491 = vmul.f32 %v479, %v490
  %vm492 = vcmask 416768
  %v493 = vsel %vm492, %v422, %v441
  %vm494 = vcmask 834560
  %v495 = vsel %vm494, %v493, %v471
  %vm496 = vcmask 203776
  %v497 = vsel %vm496, %v472, %v491
  %v500 = vcombine.low %v495, %v497
  %v502 = vunpack.c.l.s4 1983009808
  %v503 = vunpack.c.0.s8 %v502
  %v504 = vlaneseq
  %v505 = vshrl.u32 %v504, 7
  %v506 = vsub.s32 %v503, %v505
  %v507 = vrot.slane %v500, %v506
  %vm509 = vcmask 1041408
  %vm510 = vcmask 617474
  %vm511 = vmor %vm510, %vm509
  %512 = vst.msk [vmem:[%s9] sm:$0xf] %vm511, %v507
  // Predicated region
  $region38: #{rainbow_forward.1} parent=0 // pred_check
    _
  $region39: #{rainbow_forward.1} parent=0 // pred_check_branch
    %514 = sbr.rel (0) target = $region41
  $region40: #{rainbow_forward.1} parent=0 // pred_region
    _
  $region41: #{rainbow_forward.1} parent=0 // pred_fallthru
    _
  // Predicated region
  $region42: #{rainbow_forward.1} parent=0 // pred_check
    _
  $region43: #{rainbow_forward.1} parent=0 // pred_check_branch
    %516 = sbr.rel (0) target = $region45
  $region44: #{rainbow_forward.1} parent=0 // pred_region
    _
  $region45: #{rainbow_forward.1} parent=0 // pred_fallthru
    _

</llo_original>
